<compile_context>
chip_gen: v5e
topology: v5e:2x2
jax: 0.10.0
libtpu: 0.0.40
codegen_flags: <defaults>
</compile_context>

<pallas_src>
from functools import partial

import jax
import jax.numpy as jnp
from jax.experimental import pallas as pl
from jax.experimental.pallas import tpu as pltpu

LANE = 128     # lane width (last-dim granule)
SUBLANE = 8    # f32 sublane granule (second-to-last dim)


def _round_up(n, m):
    return ((n + m - 1) // m) * m


def _fused_mlp_kernel(x_ref, w_ref, b_ref, o_ref, *, n_layers, d_in):
    """Whole MLP on one batch tile.

    x_ref: (b_tile, d_in) f32 (unpadded lanes)
    w_ref: (L, D, D)      bf16, zero-padded per layer
    b_ref: (L, 1, D)      bf16, zero-padded per layer
    o_ref: (b_tile, D)    f32 (lane-dense store; padded lanes are exact zeros)
    """
    h = x_ref[...]                                    # f32 activations
    for li in range(n_layers):
        w = w_ref[li]                                 # (D, D) bf16
        if li == 0:
            w = w[:d_in, :]                           # only the real input rows
        h = jnp.dot(h.astype(jnp.bfloat16), w,
                    preferred_element_type=jnp.float32)
        h = h + b_ref[li].astype(jnp.float32)         # (1, D) broadcast over rows
        if li < n_layers - 1:
            h = jnp.maximum(h, 0.0)                   # ReLU; Dropout(eval) = identity
    o_ref[...] = h.astype(o_ref.dtype)


def init_params(node_list, key):
    """Deterministic init mimicking nn.Linear's U(-1/sqrt(fan_in), +1/sqrt(fan_in)).

    Weights are stored as [in, out] (PyTorch weight transposed)."""
    params = []
    for li in range(len(node_list) - 1):
        fan_in, fan_out = node_list[li], node_list[li + 1]
        key, kw, kb = jax.random.split(key, 3)
        bound = 1.0 / jnp.sqrt(jnp.float32(fan_in))
        w = jax.random.uniform(kw, (fan_in, fan_out), jnp.float32, -bound, bound)
        b = jax.random.uniform(kb, (fan_out,), jnp.float32, -bound, bound)
        params.append((w, b))
    return params


def pack_params(params, dtype=jnp.bfloat16):
    """Pack all layers into one (L, D, D) weight slab and one (L, 1, D) bias slab.

    Done ONCE at model setup.  D = 128-lane round-up of the widest layer; the
    zero padding is mathematically inert (zero rows/cols, zero bias)."""
    n_layers = len(params)
    d_pad = max(_round_up(max(w.shape), LANE) for w, _ in params)
    w_packed = jnp.zeros((n_layers, d_pad, d_pad), dtype)
    b_packed = jnp.zeros((n_layers, 1, d_pad), dtype)
    for li, (w, b) in enumerate(params):
        di, do = w.shape
        w_packed = w_packed.at[li, :di, :do].set(w.astype(dtype))
        b_packed = b_packed.at[li, 0, :do].set(b.astype(dtype))
    return w_packed, b_packed


def fully_connected_nn_forward(x, w_packed, b_packed, *, batch_tile=256):
    """Whole-MLP forward as a single fused pallas_call, tiled over batch.

    Returns the 128-lane-padded output of shape (b_pad, D); the caller slices
    [:B, :out_features] at its FINAL consumer (avoids an extra HBM copy here).
    `batch_tile` is sweep-able per generation ({128, 256, 512}).
    """
    n_layers, d_pad, _ = w_packed.shape
    B, d_in = x.shape

    # Batch tiling: tiny batches -> one tile (overhead-dominated anyway);
    # otherwise aim for an even tile count so v7x's 2 TCs both get work.
    if B <= 2 * SUBLANE:
        b_tile = _round_up(B, SUBLANE)
    elif B <= batch_tile:
        b_tile = _round_up(pl.cdiv(B, 2), SUBLANE)
    else:
        b_tile = batch_tile
    b_pad = _round_up(B, b_tile)
    n_tiles = b_pad // b_tile

    # Pad the batch only if B isn't a tile multiple (not hit at B=8: no copy).
    x_in = x if b_pad == B else jnp.pad(x, ((0, b_pad - B), (0, 0)))

    # Honest cost hint so XLA doesn't over-schedule around a tiny custom call.
    flops = 2 * b_pad * (d_in * d_pad + (n_layers - 1) * d_pad * d_pad)
    bytes_accessed = (x_in.size * x_in.dtype.itemsize
                      + w_packed.size * w_packed.dtype.itemsize
                      + b_packed.size * b_packed.dtype.itemsize
                      + b_pad * d_pad * 4)
    cost = pl.CostEstimate(flops=int(flops), transcendentals=0,
                           bytes_accessed=int(bytes_accessed))

    out_p = pl.pallas_call(
        partial(_fused_mlp_kernel, n_layers=n_layers, d_in=d_in),
        out_shape=jax.ShapeDtypeStruct((b_pad, d_pad), x.dtype),
        grid=(n_tiles,),
        in_specs=[
            # Activations tile over batch; last dim == full array dim (legal <128).
            pl.BlockSpec((b_tile, d_in), lambda i: (i, 0)),
            # Packed weights/biases: grid-invariant -> VMEM-resident across tiles.
            pl.BlockSpec((n_layers, d_pad, d_pad), lambda i: (0, 0, 0)),
            pl.BlockSpec((n_layers, 1, d_pad), lambda i: (0, 0, 0)),
        ],
        out_specs=pl.BlockSpec((b_tile, d_pad), lambda i: (i, 0)),
        compiler_params=pltpu.CompilerParams(
            # Batch tiles are independent -> shard across v7x's 2 TensorCores;
            # harmless no-op on v5e/v6e (1 TC) or with a single tile.
            dimension_semantics=("parallel",),
            vmem_limit_bytes=32 * 1024 * 1024,
        ),
        cost_estimate=cost,
    )(x_in, w_packed, b_packed)

    return out_p  # lane-padded; valid region is [:B, :out_features]


def _reference_forward(x, params):
    """Pure-JAX reference (eval-mode dropout = identity)."""
    h = x
    n = len(params)
    for li, (w, b) in enumerate(params):
        h = h @ w + b
        if li < n - 1:
            h = jnp.maximum(h, 0.0)
    return h


if __name__ == "__main__":
    # arg = {'node_list': [32, 64, 64, 16], 'drop_rate': 0.5}  (eval mode)
    node_list = [32, 64, 64, 16]
    batch = 8

    key = jax.random.PRNGKey(0)
    key, kx = jax.random.split(key)
    x = jax.random.normal(kx, (batch, node_list[0]), dtype=jnp.float32)

    params = init_params(node_list, key)
    w_packed, b_packed = pack_params(params)   # packed + bf16 ONCE at setup

    out_padded = fully_connected_nn_forward(x, w_packed, b_packed)
    jax.block_until_ready(out_padded)

    # Final consumer is the only place the lane padding is sliced off.
    out = out_padded[:batch, :node_list[-1]]
    assert out.shape == (batch, node_list[-1])

    # Reference uses the same bf16-quantized weights the kernel sees (f32 math);
    # tolerance relaxed for the kernel's bf16 MXU operands.
    ref_params = [(w.astype(jnp.bfloat16).astype(jnp.float32),
                   b.astype(jnp.bfloat16).astype(jnp.float32)) for w, b in params]
    ref = _reference_forward(x, ref_params)
    assert jnp.allclose(out, ref, atol=2e-2, rtol=2e-2), "mismatch vs reference"

    print("KERNEL_OK")
</pallas_src>

<mosaic_0001>
module attributes {stable_mosaic.version = 11 : i64} {
  func.func @_fused_mlp_kernel(%arg0: i32, %arg1: memref<8x32xf32, #tpu.memory_space<vmem>>, %arg2: memref<3x128x128xbf16, #tpu.memory_space<vmem>>, %arg3: memref<3x1x128xbf16, #tpu.memory_space<vmem>>, %arg4: memref<8x128xf32, #tpu.memory_space<vmem>>) attributes {dimension_semantics = [#tpu.dimension_semantics<parallel>], iteration_bounds = array<i64: 1>, scalar_prefetch = 0 : i64, scratch_operands = 0 : i64, tpu.core_type = #tpu.core_type<tc>, window_params = [{transform_indices = @transform_0, window_bounds = array<i64: 8, 32>}, {pipeline_mode = #tpu.pipeline_mode<synchronous>, transform_indices = @transform_1, window_bounds = array<i64: 3, 128, 128>}, {pipeline_mode = #tpu.pipeline_mode<synchronous>, transform_indices = @transform_2, window_bounds = array<i64: 3, 1, 128>}, {transform_indices = @transform_3, window_bounds = array<i64: 8, 128>}]} {
    %c0 = arith.constant 0 : index
    %c0_0 = arith.constant 0 : index
    %0 = vector.load %arg1[%c0, %c0_0] : memref<8x32xf32, #tpu.memory_space<vmem>>, vector<8x32xf32>
    %c0_1 = arith.constant 0 : index
    %c0_2 = arith.constant 0 : index
    %c0_3 = arith.constant 0 : index
    %1 = vector.load %arg2[%c0_1, %c0_2, %c0_3] : memref<3x128x128xbf16, #tpu.memory_space<vmem>>, vector<1x128x128xbf16>
    %2 = vector.shape_cast %1 : vector<1x128x128xbf16> to vector<128x128xbf16>
    %3 = vector.extract_strided_slice %2 {offsets = [0, 0], sizes = [32, 128], strides = [1, 1]} : vector<128x128xbf16> to vector<32x128xbf16>
    %4 = arith.truncf %0 : vector<8x32xf32> to vector<8x32xbf16>
    %cst = arith.constant dense<0.000000e+00> : vector<8x128xf32>
    %5 = tpu.matmul %4, %3, %cst {dimension_numbers = #tpu.dot_dimension_numbers<[1], [0], [0], [1], [0, 0, 1, 1], [], []>} : vector<8x32xbf16>, vector<32x128xbf16>, vector<8x128xf32> -> vector<8x128xf32>
    %c0_4 = arith.constant 0 : index
    %c0_5 = arith.constant 0 : index
    %c0_6 = arith.constant 0 : index
    %6 = vector.load %arg3[%c0_4, %c0_5, %c0_6] : memref<3x1x128xbf16, #tpu.memory_space<vmem>>, vector<1x1x128xbf16>
    %7 = vector.shape_cast %6 : vector<1x1x128xbf16> to vector<1x128xbf16>
    %8 = arith.extf %7 : vector<1x128xbf16> to vector<1x128xf32>
    %9 = vector.broadcast %8 : vector<1x128xf32> to vector<8x128xf32>
    %10 = arith.addf %5, %9 : vector<8x128xf32>
    %cst_7 = arith.constant 0.000000e+00 : f32
    %11 = vector.broadcast %cst_7 : f32 to vector<8x128xf32>
    %12 = arith.maximumf %10, %11 : vector<8x128xf32>
    %c1 = arith.constant 1 : index
    %c0_8 = arith.constant 0 : index
    %c0_9 = arith.constant 0 : index
    %13 = vector.load %arg2[%c1, %c0_8, %c0_9] : memref<3x128x128xbf16, #tpu.memory_space<vmem>>, vector<1x128x128xbf16>
    %14 = vector.shape_cast %13 : vector<1x128x128xbf16> to vector<128x128xbf16>
    %15 = arith.truncf %12 : vector<8x128xf32> to vector<8x128xbf16>
    %cst_10 = arith.constant dense<0.000000e+00> : vector<8x128xf32>
    %16 = tpu.matmul %15, %14, %cst_10 {dimension_numbers = #tpu.dot_dimension_numbers<[1], [0], [0], [1], [0, 0, 1, 1], [], []>} : vector<8x128xbf16>, vector<128x128xbf16>, vector<8x128xf32> -> vector<8x128xf32>
    %c1_11 = arith.constant 1 : index
    %c0_12 = arith.constant 0 : index
    %c0_13 = arith.constant 0 : index
    %17 = vector.load %arg3[%c1_11, %c0_12, %c0_13] : memref<3x1x128xbf16, #tpu.memory_space<vmem>>, vector<1x1x128xbf16>
    %18 = vector.shape_cast %17 : vector<1x1x128xbf16> to vector<1x128xbf16>
    %19 = arith.extf %18 : vector<1x128xbf16> to vector<1x128xf32>
    %20 = vector.broadcast %19 : vector<1x128xf32> to vector<8x128xf32>
    %21 = arith.addf %16, %20 : vector<8x128xf32>
    %cst_14 = arith.constant 0.000000e+00 : f32
    %22 = vector.broadcast %cst_14 : f32 to vector<8x128xf32>
    %23 = arith.maximumf %21, %22 : vector<8x128xf32>
    %c2 = arith.constant 2 : index
    %c0_15 = arith.constant 0 : index
    %c0_16 = arith.constant 0 : index
    %24 = vector.load %arg2[%c2, %c0_15, %c0_16] : memref<3x128x128xbf16, #tpu.memory_space<vmem>>, vector<1x128x128xbf16>
    %25 = vector.shape_cast %24 : vector<1x128x128xbf16> to vector<128x128xbf16>
    %26 = arith.truncf %23 : vector<8x128xf32> to vector<8x128xbf16>
    %cst_17 = arith.constant dense<0.000000e+00> : vector<8x128xf32>
    %27 = tpu.matmul %26, %25, %cst_17 {dimension_numbers = #tpu.dot_dimension_numbers<[1], [0], [0], [1], [0, 0, 1, 1], [], []>} : vector<8x128xbf16>, vector<128x128xbf16>, vector<8x128xf32> -> vector<8x128xf32>
    %c2_18 = arith.constant 2 : index
    %c0_19 = arith.constant 0 : index
    %c0_20 = arith.constant 0 : index
    %28 = vector.load %arg3[%c2_18, %c0_19, %c0_20] : memref<3x1x128xbf16, #tpu.memory_space<vmem>>, vector<1x1x128xbf16>
    %29 = vector.shape_cast %28 : vector<1x1x128xbf16> to vector<1x128xbf16>
    %30 = arith.extf %29 : vector<1x128xbf16> to vector<1x128xf32>
    %31 = vector.broadcast %30 : vector<1x128xf32> to vector<8x128xf32>
    %32 = arith.addf %27, %31 : vector<8x128xf32>
    %c0_21 = arith.constant 0 : index
    %c0_22 = arith.constant 0 : index
    %33 = vector.load %arg4[%c0_21, %c0_22] : memref<8x128xf32, #tpu.memory_space<vmem>>, vector<8x128xf32>
    tpu.vector_store %arg4[%c0_21, %c0_22], %32 {strides = array<i32>} : memref<8x128xf32, #tpu.memory_space<vmem>>, vector<8x128xf32>,
    return
  }
  func.func @transform_0(%arg0: i32) -> (i32, i32) {
    %c0_i32 = arith.constant 0 : i32
    %c0_i32_0 = arith.constant 0 : i32
    return %arg0, %c0_i32 : i32, i32
  }
  func.func @transform_1(%arg0: i32) -> (i32, i32, i32) {
    %c0_i32 = arith.constant 0 : i32
    %c0_i32_0 = arith.constant 0 : i32
    %c0_i32_1 = arith.constant 0 : i32
    %c0_i32_2 = arith.constant 0 : i32
    return %c0_i32, %c0_i32_0, %c0_i32_1 : i32, i32, i32
  }
  func.func @transform_2(%arg0: i32) -> (i32, i32, i32) {
    %c0_i32 = arith.constant 0 : i32
    %c0_i32_0 = arith.constant 0 : i32
    %c0_i32_1 = arith.constant 0 : i32
    %c0_i32_2 = arith.constant 0 : i32
    return %c0_i32, %c0_i32_0, %c0_i32_1 : i32, i32, i32
  }
  func.func @transform_3(%arg0: i32) -> (i32, i32) {
    %c0_i32 = arith.constant 0 : i32
    %c0_i32_0 = arith.constant 0 : i32
    return %arg0, %c0_i32 : i32, i32
  }
}

</mosaic_0001>

<llo_original>
// kernel: tpu_custom_call.1
$region0: #{tpu_custom_call.1}
  #allocation0 [shape = 'u32[]', space=smem, size = 0x4, offset = 0x4, fixed_abs, tag = 'smem constant byte address 0x4 - core index']
  #allocation1 [shape = 'u32[72,128]{1,0:T(1,128)}', space=vmem, size = 0x9000, scoped, tag = 'internal scratch']
  %s0 = inlined_call_operand.hbm [shape: f32[8,32], index: 0, kind: input, shape index: {}]
  %s1 = inlined_call_operand.hbm [shape: bf16[3,128,128], index: 1, kind: input, shape index: {}]
  %s2 = inlined_call_operand.vmem [shape: bf16[3,1,128], index: 2, kind: input, shape index: {}]
  %s3 = inlined_call_operand.hbm [shape: f32[8,128], index: 3, kind: output, shape index: {}]
  %s4 = sld [smem:[#allocation0]]
  $region30: #{tpu_custom_call.1} parent=0
    _
  %s6 = ssub.s32 1, %s4
  %s7 = scalar_select 0, %s6, %s4
  $region1: #{tpu_custom_call.1} parent=0
    #allocation2 [shape = 'u8[4096]{0}', space=vmem, size = 0x1000, scoped, tag = 'input window, operand 0, single buffered']
    #allocation3 [shape = 's32[1]{0}', space=sflag, size = 0x4, scoped, tag = 'scoped memory for tpu_custom_call.1']
    #allocation4 [shape = 's32[1]{0}', space=sflag, size = 0x4, scoped, tag = 'scoped memory for tpu_custom_call.1']
    #allocation5 [shape = 'u8[98304]{0}', space=vmem, size = 0x18000, scoped, tag = 'input window, operand 1, single buffered']
    #allocation6 [shape = 's32[1]{0}', space=sflag, size = 0x4, scoped, tag = 'scoped memory for tpu_custom_call.1']
    #allocation7 [shape = 'u8[4096]{0}', space=vmem, size = 0x1000, scoped, tag = 'output window, operand 0, single buffered']
    %8 = vsyncpa [#allocation3], 0
    %9 = vsyncpa [#allocation6], 0
    %10 = vsyncpa [#allocation4], 0
    // Predicated region
    $region2: #{tpu_custom_call.1} parent=1 // pred_check
      _
    $region3: #{tpu_custom_call.1} parent=1 // pred_check_branch
      %12 = sbr.rel (0) target = $region5
    $region4: #{tpu_custom_call.1} parent=1 // pred_region
      %14 = vsyncadd [#allocation3], 0
      %s16 = sshll.u32 %s0, 4
      %s17 = int_to_ptr.hbm [resolvable:$true] %s16
      %s18 = sshll.u32 [#allocation2], 4
      %s19 = int_to_ptr.vmem [resolvable:$true] %s18
      %21 = dma.hbm_to_vmem [thread:$0]  %s17, 128, %s19, [#allocation3]
    $region5: #{tpu_custom_call.1} parent=1 // pred_fallthru
      _
    // Predicated region
    $region6: #{tpu_custom_call.1} parent=1 // pred_check
      _
    $region7: #{tpu_custom_call.1} parent=1 // pred_check_branch
      %23 = sbr.rel (0) target = $region9
    $region8: #{tpu_custom_call.1} parent=1 // pred_region
      %25 = vsyncadd [#allocation6], 0
      %s26 = sshll.u32 %s1, 4
      %s27 = int_to_ptr.hbm [resolvable:$true] %s26
      %s28 = sshll.u32 [#allocation5], 4
      %s29 = int_to_ptr.vmem [resolvable:$true] %s28
      %34 = dma.hbm_to_vmem [thread:$0]  %s27, 3072, %s29, [#allocation6], 64, 64, 4
    $region9: #{tpu_custom_call.1} parent=1 // pred_fallthru
      _
    // Predicated region
    $region10: #{tpu_custom_call.1} parent=1 // pred_check
      _
    $region11: #{tpu_custom_call.1} parent=1 // pred_check_branch
      %36 = sbr.rel (0) target = $region13
    $region12: #{tpu_custom_call.1} parent=1 // pred_region
      _
    $region13: #{tpu_custom_call.1} parent=1 // pred_fallthru
      _
    // Predicated region
    $region14: #{tpu_custom_call.1} parent=1 // pred_check
      _
    $region15: #{tpu_custom_call.1} parent=1 // pred_check_branch
      %38 = sbr.rel (0) target = $region17
    $region16: #{tpu_custom_call.1} parent=1 // pred_region
      %40 = dma.done [#allocation3], 128
    $region17: #{tpu_custom_call.1} parent=1 // pred_fallthru
      _
    // Predicated region
    $region18: #{tpu_custom_call.1} parent=1 // pred_check
      _
    $region19: #{tpu_custom_call.1} parent=1 // pred_check_branch
      %42 = sbr.rel (0) target = $region21
    $region20: #{tpu_custom_call.1} parent=1 // pred_region
      %44 = dma.done [#allocation6], 3072
    $region21: #{tpu_custom_call.1} parent=1 // pred_fallthru
      _
    %v46 = vld [vmem:[#allocation2] sm:$0xff]
    %v47 = vld [vmem:[#allocation5] sm:$0xf]
    %v48 = vld [vmem:[#allocation5 + $0x4] sm:$0xf]
    %v49 = vld [vmem:[#allocation5 + $0x8] sm:$0xf]
    %v50 = vld [vmem:[#allocation5 + $0xc] sm:$0xf]
    %v51 = vpack.c.bf16 %v46, %v46
    %v52 = vld [vmem:[%s2] sm:$0x1]
    %v53 = vunpack.c.l.bf16 %v52
    %v54 = vperm.slane %v53, 0
    %v59 = vunpack.c.l.b16 %v47
    %v60 = vunpack.c.l.b16 %v48
    %v61 = vunpack.c.l.b16 %v49
    %v62 = vunpack.c.l.b16 %v50
    %v63 = vpack.c.b16 %v60, %v59
    %v64 = vpack.c.b16 %v62, %v61
    %vm67 = vcmask 261120
    %v69 = vsel %vm67, %v51, 0
    %71 = vmatpush.bf16.msra.mxu0 0
    %72 = vmatpush.bf16.msra.mxu0 0
    %73 = vmatpush.bf16.msra.mxu0 0
    %74 = vmatpush.bf16.msra.mxu0 0
    %75 = vmatpush.bf16.msra.mxu0 0
    %76 = vmatpush.bf16.msra.mxu0 0
    %77 = vmatpush.bf16.msra.mxu0 %v64
    %78 = vmatpush.bf16.msra.mxu0 %v63
    %79 = vmatmul.bf16.gmra.mxu0 %v69
    %v80 = vpop.f32.mrf.mxu0
    %v81 = vadd.f32 %v54, %v80
    %v82 = vpop.f32.mrf.mxu0
    %83 = vdwg.mxu0
    %v84 = vmax.f32 %v81, 0.0
    %s85 = scalar_lea.vmem [#allocation5], 64
    %v86 = vld [vmem:[%s85] sm:$0xf]
    %v87 = vld [vmem:[%s85 + $0x4] sm:$0xf]
    %v88 = vld [vmem:[%s85 + $0x8] sm:$0xf]
    %v89 = vld [vmem:[%s85 + $0xc] sm:$0xf]
    %v90 = vld [vmem:[%s85 + $0x10] sm:$0xf]
    %v91 = vld [vmem:[%s85 + $0x14] sm:$0xf]
    %v92 = vld [vmem:[%s85 + $0x18] sm:$0xf]
    %v93 = vld [vmem:[%s85 + $0x1c] sm:$0xf]
    %v94 = vld [vmem:[%s85 + $0x20] sm:$0xf]
    %v95 = vld [vmem:[%s85 + $0x24] sm:$0xf]
    %v96 = vld [vmem:[%s85 + $0x28] sm:$0xf]
    %v97 = vld [vmem:[%s85 + $0x2c] sm:$0xf]
    %v98 = vld [vmem:[%s85 + $0x30] sm:$0xf]
    %v99 = vld [vmem:[%s85 + $0x34] sm:$0xf]
    %v100 = vld [vmem:[%s85 + $0x38] sm:$0xf]
    %v101 = vld [vmem:[%s85 + $0x3c] sm:$0xf]
    %v102 = vpack.c.bf16 %v84, %v84
    %s103 = scalar_lea.vmem %s2, 1
    %v104 = vld [vmem:[%s103] sm:$0x1]
    %v105 = vunpack.c.l.bf16 %v104
    %v106 = vperm.slane %v105, 0
    %v123 = vunpack.c.l.b16 %v86
    %v124 = vunpack.c.l.b16 %v87
    %v125 = vunpack.c.l.b16 %v88
    %v126 = vunpack.c.l.b16 %v89
    %v127 = vunpack.c.l.b16 %v90
    %v128 = vunpack.c.l.b16 %v91
    %v129 = vunpack.c.l.b16 %v92
    %v130 = vunpack.c.l.b16 %v93
    %v131 = vunpack.c.l.b16 %v94
    %v132 = vunpack.c.l.b16 %v95
    %v133 = vunpack.c.l.b16 %v96
    %v134 = vunpack.c.l.b16 %v97
    %v135 = vunpack.c.l.b16 %v98
    %v136 = vunpack.c.l.b16 %v99
    %v137 = vunpack.c.l.b16 %v100
    %v138 = vunpack.c.l.b16 %v101
    %v139 = vpack.c.b16 %v124, %v123
    %v140 = vpack.c.b16 %v126, %v125
    %v141 = vpack.c.b16 %v128, %v127
    %v142 = vpack.c.b16 %v130, %v129
    %v143 = vpack.c.b16 %v132, %v131
    %v144 = vpack.c.b16 %v134, %v133
    %v145 = vpack.c.b16 %v136, %v135
    %v146 = vpack.c.b16 %v138, %v137
    %155 = vmatpush.bf16.msra.mxu0 %v146
    %156 = vmatpush.bf16.msra.mxu0 %v145
    %157 = vmatpush.bf16.msra.mxu0 %v144
    %158 = vmatpush.bf16.msra.mxu0 %v143
    %159 = vmatpush.bf16.msra.mxu0 %v142
    %160 = vmatpush.bf16.msra.mxu0 %v141
    %161 = vmatpush.bf16.msra.mxu0 %v140
    %162 = vmatpush.bf16.msra.mxu0 %v139
    %163 = vmatmul.bf16.gmra.mxu0 %v102
    %v164 = vpop.f32.mrf.mxu0
    %v165 = vadd.f32 %v106, %v164
    %v166 = vpop.f32.mrf.mxu0
    %167 = vdwg.mxu0
    %v168 = vmax.f32 %v165, 0.0
    %s169 = scalar_lea.vmem [#allocation5], 128
    %v170 = vld [vmem:[%s169] sm:$0xf]
    %v171 = vld [vmem:[%s169 + $0x4] sm:$0xf]
    %v172 = vld [vmem:[%s169 + $0x8] sm:$0xf]
    %v173 = vld [vmem:[%s169 + $0xc] sm:$0xf]
    %v174 = vld [vmem:[%s169 + $0x10] sm:$0xf]
    %v175 = vld [vmem:[%s169 + $0x14] sm:$0xf]
    %v176 = vld [vmem:[%s169 + $0x18] sm:$0xf]
    %v177 = vld [vmem:[%s169 + $0x1c] sm:$0xf]
    %v178 = vld [vmem:[%s169 + $0x20] sm:$0xf]
    %v179 = vld [vmem:[%s169 + $0x24] sm:$0xf]
    %v180 = vld [vmem:[%s169 + $0x28] sm:$0xf]
    %v181 = vld [vmem:[%s169 + $0x2c] sm:$0xf]
    %v182 = vld [vmem:[%s169 + $0x30] sm:$0xf]
    %v183 = vld [vmem:[%s169 + $0x34] sm:$0xf]
    %v184 = vld [vmem:[%s169 + $0x38] sm:$0xf]
    %v185 = vld [vmem:[%s169 + $0x3c] sm:$0xf]
    %v186 = vpack.c.bf16 %v168, %v168
    %s187 = scalar_lea.vmem %s2, 2
    %v188 = vld [vmem:[%s187] sm:$0x1]
    %v189 = vunpack.c.l.bf16 %v188
    %v190 = vperm.slane %v189, 0
    %v207 = vunpack.c.l.b16 %v170
    %v208 = vunpack.c.l.b16 %v171
    %v209 = vunpack.c.l.b16 %v172
    %v210 = vunpack.c.l.b16 %v173
    %v211 = vunpack.c.l.b16 %v174
    %v212 = vunpack.c.l.b16 %v175
    %v213 = vunpack.c.l.b16 %v176
    %v214 = vunpack.c.l.b16 %v177
    %v215 = vunpack.c.l.b16 %v178
    %v216 = vunpack.c.l.b16 %v179
    %v217 = vunpack.c.l.b16 %v180
    %v218 = vunpack.c.l.b16 %v181
    %v219 = vunpack.c.l.b16 %v182
    %v220 = vunpack.c.l.b16 %v183
    %v221 = vunpack.c.l.b16 %v184
    %v222 = vunpack.c.l.b16 %v185
    %v223 = vpack.c.b16 %v208, %v207
    %v224 = vpack.c.b16 %v210, %v209
    %v225 = vpack.c.b16 %v212, %v211
    %v226 = vpack.c.b16 %v214, %v213
    %v227 = vpack.c.b16 %v216, %v215
    %v228 = vpack.c.b16 %v218, %v217
    %v229 = vpack.c.b16 %v220, %v219
    %v230 = vpack.c.b16 %v222, %v221
    %239 = vmatpush.bf16.msra.mxu0 %v230
    %240 = vmatpush.bf16.msra.mxu0 %v229
    %241 = vmatpush.bf16.msra.mxu0 %v228
    %242 = vmatpush.bf16.msra.mxu0 %v227
    %243 = vmatpush.bf16.msra.mxu0 %v226
    %244 = vmatpush.bf16.msra.mxu0 %v225
    %245 = vmatpush.bf16.msra.mxu0 %v224
    %246 = vmatpush.bf16.msra.mxu0 %v223
    %247 = vmatmul.bf16.gmra.mxu0 %v186
    %v248 = vpop.f32.mrf.mxu0
    %v249 = vadd.f32 %v190, %v248
    %v250 = vpop.f32.mrf.mxu0
    %251 = vdwg.mxu0
    %252 = vst [vmem:[#allocation7] sm:$0xff] %v249
    // Predicated region
    $region22: #{tpu_custom_call.1} parent=1 // pred_check
      _
    $region23: #{tpu_custom_call.1} parent=1 // pred_check_branch
      %254 = sbr.rel (0) target = $region25
    $region24: #{tpu_custom_call.1} parent=1 // pred_region
      %256 = vsyncadd [#allocation4], 0
      %s258 = sshll.u32 [#allocation7], 4
      %s259 = int_to_ptr.vmem [resolvable:$true] %s258
      %s260 = sshll.u32 %s3, 4
      %s261 = int_to_ptr.hbm [resolvable:$true] %s260
      %263 = dma.vmem_to_hbm [thread:$0]  %s259, 128, %s261, [#allocation4]
    $region25: #{tpu_custom_call.1} parent=1 // pred_fallthru
      _
    // Predicated region
    $region26: #{tpu_custom_call.1} parent=1 // pred_check
      _
    $region27: #{tpu_custom_call.1} parent=1 // pred_check_branch
      %265 = sbr.rel (0) target = $region29
    $region28: #{tpu_custom_call.1} parent=1 // pred_region
      %267 = dma.done [#allocation4], 128
    $region29: #{tpu_custom_call.1} parent=1 // pred_fallthru
      _
    %268 = vsyncpa [#allocation3], 1
    %269 = vsyncpa [#allocation6], 1
    %270 = vsyncpa [#allocation4], 1

</llo_original>
